<compile_context>
chip_gen: v5e
topology: v5e:2x2
jax: 0.10.0
libtpu: 0.0.40
codegen_flags: <defaults>
</compile_context>

<pallas_src>
import functools
import math

import jax
import jax.numpy as jnp
from jax import lax
from jax.experimental import pallas as pl
from jax.experimental.pallas import tpu as pltpu


# ---------------------------------------------------------------------------
# Hardware / tiling helpers
# ---------------------------------------------------------------------------
def _vmem_limit_bytes():
    """Scoped-VMEM budget with headroom: ~3/4 of physical capacity
    (96 MiB on the 128 MiB v5e/v6e, 48 MiB on the 64 MiB v7x)."""
    try:
        cap = int(pltpu.get_tpu_info().vmem_capacity_bytes)
    except Exception:
        cap = 64 * 1024 * 1024                 # conservative (v7x) fallback
    return min((cap * 3) // 4, 100 * 1024 * 1024)


def _fit_tile(n, target, mult=8):
    """Largest divisor of n that is <= target and a multiple of `mult`
    (sublane/lane friendly).  Falls back to the full extent n, which is always
    a legal block dimension."""
    if n <= target:
        return n
    for t in range(target, 0, -1):
        if n % t == 0 and t % mult == 0:
            return t
    return n


def _heads_per_block(num_heads, d_k):
    """Heads processed per flash-attention block.  Pick the smallest head
    group whose lane width (hpb * d_k) is layout-legal (multiple of 128, or
    the full d_model) and >= 128 when possible, so the PV-matmul N dim and the
    output stores are lane-dense (no masked vst on v6e/v7x)."""
    candidates = [h for h in range(1, num_heads + 1)
                  if num_heads % h == 0
                  and ((h * d_k) % 128 == 0 or h == num_heads)]
    for h in candidates:
        if h * d_k >= 128:
            return h
    return candidates[-1]


def _col_tile(d_model, vmem_limit, n_weights=3):
    """Output-column tile for the projection weights.  Keep full (D, D)
    blocks resident when they comfortably fit the scoped-VMEM budget
    (constant index_map -> fetched once); otherwise tile the column axis so
    large D stays viable on v7x's 64 MiB VMEM."""
    full_bytes = n_weights * d_model * d_model * 2 * 2     # bf16, ~2x buffers
    if full_bytes <= vmem_limit // 2:
        return d_model
    return _fit_tile(d_model, 1024, mult=128)


# ---------------------------------------------------------------------------
# Kernel 1: fused Q/K/V input projections  y = x @ W + b
# (scale * log2(e) is pre-folded into W_q / b_q at parameter-prep time)
# ---------------------------------------------------------------------------
def _qkv_proj_kernel(q_ref, k_ref, v_ref,
                     wq_ref, bq_ref, wk_ref, bk_ref, wv_ref, bv_ref,
                     qp_ref, kp_ref, vp_ref):
    def proj(x_ref, w_ref, b_ref):
        x = x_ref[0].astype(jnp.bfloat16)                  # (ts, D) MXU operand
        y = jnp.dot(x, w_ref[...],                         # bf16 weights
                    preferred_element_type=jnp.float32)    # f32 accumulation
        return y + b_ref[...]                              # bias add in f32

    qp_ref[0] = proj(q_ref, wq_ref, bq_ref).astype(qp_ref.dtype)
    kp_ref[0] = proj(k_ref, wk_ref, bk_ref).astype(kp_ref.dtype)
    vp_ref[0] = proj(v_ref, wv_ref, bv_ref).astype(vp_ref.dtype)


# ---------------------------------------------------------------------------
# Kernel 2: flash attention (online softmax, exp2) over a head-group column
# block.  Grid: (B, head-groups, q-tiles, kv-tiles); kv axis is "arbitrary".
# ---------------------------------------------------------------------------
def _flash_attn_kernel(d_k, hpb, q_ref, k_ref, v_ref, o_ref,
                       m_sc, l_sc, acc_sc):
    ki = pl.program_id(3)

    @pl.when(ki == 0)
    def _():
        m_sc[...] = jnp.full(m_sc.shape, -jnp.inf, jnp.float32)
        l_sc[...] = jnp.zeros(l_sc.shape, jnp.float32)
        acc_sc[...] = jnp.zeros(acc_sc.shape, jnp.float32)

    q = q_ref[0]        # (tq, hpb*d_k) bf16, pre-scaled by log2(e)/sqrt(d_k)
    k = k_ref[0]        # (tk, hpb*d_k) bf16
    v = v_ref[0]        # (tk, hpb*d_k) bf16

    for h in range(hpb):                                   # static unroll
        cols = slice(h * d_k, (h + 1) * d_k)
        # Contract last dims of both operands -> no explicit K transpose.
        s = lax.dot_general(q[:, cols], k[:, cols], (((1,), (1,)), ((), ())),
                            preferred_element_type=jnp.float32)   # (tq, tk)
        m_prev = m_sc[h]
        m_new = jnp.maximum(m_prev, jnp.max(s, axis=-1, keepdims=True))
        alpha = jnp.exp2(m_prev - m_new)    # exp2: log2(e) folded into W_q
        p = jnp.exp2(s - m_new)
        l_sc[h] = alpha * l_sc[h] + jnp.sum(p, axis=-1, keepdims=True)
        acc_sc[h] = alpha * acc_sc[h] + jnp.dot(
            p.astype(v.dtype), v[:, cols], preferred_element_type=jnp.float32)
        m_sc[h] = m_new

    @pl.when(ki == pl.num_programs(3) - 1)
    def _():
        # Exact reciprocal: once per output row, negligible cost, tighter
        # accuracy than the approx EUP path.
        pieces = [acc_sc[h] / l_sc[h] for h in range(hpb)]
        o_ref[0] = jnp.concatenate(pieces, axis=-1).astype(o_ref.dtype)


# ---------------------------------------------------------------------------
# Kernel 3: output projection  y = x @ W_o + b_o
# ---------------------------------------------------------------------------
def _linear_kernel(x_ref, w_ref, b_ref, o_ref):
    x = x_ref[0].astype(jnp.bfloat16)
    y = jnp.dot(x, w_ref[...], preferred_element_type=jnp.float32) + b_ref[...]
    o_ref[0] = y.astype(o_ref.dtype)


# ---------------------------------------------------------------------------
# Parameter prep (once, outside the hot path):
#   nn.Linear weight (out, in) -> (in, out) transpose + bf16 cast,
#   bias -> (1, D) f32; 1/sqrt(d_k) * log2(e) folded into W_q / b_q.
# ---------------------------------------------------------------------------
def prepare_params(raw_params, num_heads):
    wq, bq, wk, bk, wv, bv, wo, bo = raw_params
    d_model = jnp.asarray(wq).shape[0]
    d_k = d_model // num_heads
    q_scale = (1.0 / math.sqrt(d_k)) * math.log2(math.e)

    def prep_w(w, scale=1.0):
        return (jnp.asarray(w, jnp.float32).T * scale).astype(jnp.bfloat16)

    def prep_b(b, scale=1.0):
        return (jnp.asarray(b, jnp.float32) * scale).reshape(1, -1)

    return dict(wq=prep_w(wq, q_scale), bq=prep_b(bq, q_scale),
                wk=prep_w(wk), bk=prep_b(bk),
                wv=prep_w(wv), bv=prep_b(bv),
                wo=prep_w(wo), bo=prep_b(bo))


# ---------------------------------------------------------------------------
# Forward pass
# ---------------------------------------------------------------------------
def multi_head_attention(Q, K, V, params, *, num_heads,
                         ts=512, tq=256, tk=512):
    """Pallas MHA forward.  Q, K, V: (B, S, D) float32."""
    B, S, D = Q.shape
    assert D % num_heads == 0, "d_model must be divisible by num_heads"
    d_k = D // num_heads

    vmem_limit = _vmem_limit_bytes()
    ts, tq, tk = _fit_tile(S, ts), _fit_tile(S, tq), _fit_tile(S, tk)
    hpb = _heads_per_block(num_heads, d_k)     # heads per flash block
    gw = hpb * d_k                             # head-group lane width
    HG = num_heads // hpb                      # number of head groups
    tn = _col_tile(D, vmem_limit)              # projection output-column tile
    NC = D // tn

    # ---- 1) fused QKV projections: grid (B, col-tiles, seq-tiles) ----------
    x_spec = pl.BlockSpec((1, ts, D), lambda b, ci, si: (b, si, 0))
    w_spec = pl.BlockSpec((D, tn), lambda b, ci, si: (0, ci))
    b_spec = pl.BlockSpec((1, tn), lambda b, ci, si: (0, ci))
    y_spec = pl.BlockSpec((1, ts, tn), lambda b, ci, si: (b, si, ci))
    proj_out = jax.ShapeDtypeStruct((B, S, D), jnp.bfloat16)

    qkv_cost = pl.CostEstimate(
        flops=2 * 3 * B * S * D * D, transcendentals=0,
        bytes_accessed=3 * B * S * D * 4 + 3 * D * D * 2 + 3 * B * S * D * 2)

    qp, kp, vp = pl.pallas_call(
        _qkv_proj_kernel,
        out_shape=(proj_out, proj_out, proj_out),
        grid_spec=pltpu.PrefetchScalarGridSpec(
            num_scalar_prefetch=0,
            grid=(B, NC, S // ts),
            in_specs=[x_spec, x_spec, x_spec,
                      w_spec, b_spec, w_spec, b_spec, w_spec, b_spec],
            out_specs=[y_spec, y_spec, y_spec]),
        compiler_params=pltpu.CompilerParams(
            dimension_semantics=("parallel", "parallel", "parallel"),
            vmem_limit_bytes=vmem_limit),
        cost_estimate=qkv_cost,
    )(Q, K, V, params["wq"], params["bq"], params["wk"], params["bk"],
      params["wv"], params["bv"])

    # ---- 2) flash attention on head-group COLUMN blocks of (B, S, D) -------
    # Head h occupies columns [h*d_k, (h+1)*d_k) of the projected activations,
    # so reading column blocks of width hpb*d_k is exactly split_heads and
    # writing the same columns of the output is exactly combine_heads — no
    # XLA transpose passes.
    q_spec = pl.BlockSpec((1, tq, gw), lambda b, g, qi, ki: (b, qi, g))
    kv_spec = pl.BlockSpec((1, tk, gw), lambda b, g, qi, ki: (b, ki, g))
    o_spec = pl.BlockSpec((1, tq, gw), lambda b, g, qi, ki: (b, qi, g))

    flash_cost = pl.CostEstimate(
        flops=4 * B * S * S * D,
        transcendentals=B * num_heads * S * S,
        bytes_accessed=(2 * B * S * D * 2) * (S // tq) + 2 * B * S * D * 2)

    attn = pl.pallas_call(
        functools.partial(_flash_attn_kernel, d_k, hpb),
        out_shape=jax.ShapeDtypeStruct((B, S, D), jnp.bfloat16),
        grid_spec=pltpu.PrefetchScalarGridSpec(
            num_scalar_prefetch=0,
            grid=(B, HG, S // tq, S // tk),
            in_specs=[q_spec, kv_spec, kv_spec],
            out_specs=o_spec,
            scratch_shapes=[pltpu.VMEM((hpb, tq, 1), jnp.float32),    # run max
                            pltpu.VMEM((hpb, tq, 1), jnp.float32),    # run sum
                            pltpu.VMEM((hpb, tq, d_k), jnp.float32)]),  # acc
        compiler_params=pltpu.CompilerParams(
            dimension_semantics=("parallel", "parallel", "parallel",
                                 "arbitrary"),
            vmem_limit_bytes=vmem_limit),
        cost_estimate=flash_cost,
    )(qp, kp, vp)

    # ---- 3) output projection (reads (B, S, D) directly, no combine) -------
    out_cost = pl.CostEstimate(
        flops=2 * B * S * D * D, transcendentals=0,
        bytes_accessed=B * S * D * 2 + D * D * 2 + B * S * D * 4)

    out = pl.pallas_call(
        _linear_kernel,
        out_shape=jax.ShapeDtypeStruct((B, S, D), Q.dtype),
        grid_spec=pltpu.PrefetchScalarGridSpec(
            num_scalar_prefetch=0,
            grid=(B, NC, S // ts),
            in_specs=[x_spec, w_spec, b_spec],
            out_specs=y_spec),
        compiler_params=pltpu.CompilerParams(
            dimension_semantics=("parallel", "parallel", "parallel"),
            vmem_limit_bytes=vmem_limit),
        cost_estimate=out_cost,
    )(attn, params["wo"], params["bo"])

    return out


# ---------------------------------------------------------------------------
# Plain-JAX reference matching the PyTorch module semantics (f32 throughout).
# ---------------------------------------------------------------------------
def _reference_mha(Q, K, V, params, *, num_heads):
    B, S, D = Q.shape
    d_k = D // num_heads
    wq, bq, wk, bk, wv, bv, wo, bo = params

    def lin(x, w, b):
        return x @ w.T + b

    def split(x):
        return x.reshape(B, S, num_heads, d_k).transpose(0, 2, 1, 3)

    Qh, Kh, Vh = split(lin(Q, wq, bq)), split(lin(K, wk, bk)), split(lin(V, wv, bv))
    scores = jnp.einsum("bhqd,bhkd->bhqk", Qh, Kh) / math.sqrt(d_k)
    probs = jax.nn.softmax(scores, axis=-1)
    out = jnp.einsum("bhqk,bhkd->bhqd", probs, Vh)
    out = out.transpose(0, 2, 1, 3).reshape(B, S, D)
    return lin(out, wo, bo)


def _init_params(key, d_model):
    """Deterministic nn.Linear-style init: U(-1/sqrt(in), 1/sqrt(in))."""
    bound = 1.0 / math.sqrt(d_model)
    keys = jax.random.split(key, 8)
    params = []
    for i in range(4):
        w = jax.random.uniform(keys[2 * i], (d_model, d_model),
                               minval=-bound, maxval=bound, dtype=jnp.float32)
        b = jax.random.uniform(keys[2 * i + 1], (d_model,),
                               minval=-bound, maxval=bound, dtype=jnp.float32)
        params += [w, b]
    return tuple(params)


def _run_case(key, B, S, D, H, **tiles):
    kq, kk, kv, kp = jax.random.split(key, 4)
    Q = jax.random.normal(kq, (B, S, D), dtype=jnp.float32)
    K = jax.random.normal(kk, (B, S, D), dtype=jnp.float32)
    V = jax.random.normal(kv, (B, S, D), dtype=jnp.float32)
    raw = _init_params(kp, D)
    params = prepare_params(raw, num_heads=H)

    out = jax.block_until_ready(
        multi_head_attention(Q, K, V, params, num_heads=H, **tiles))
    ref = _reference_mha(Q, K, V, raw, num_heads=H)
    assert out.shape == (B, S, D)
    # bf16 MXU operands / bf16 intermediates -> ~5e-2 accuracy budget.
    assert jnp.allclose(out, ref, atol=5e-2, rtol=5e-2), \
        f"mismatch vs reference (B={B}, S={S}, D={D}, H={H})"


if __name__ == "__main__":
    key = jax.random.PRNGKey(0)
    k1, k2 = jax.random.split(key)

    # Small shape consistent with the module (batch=2, seq=8, hidden=32, H=4).
    _run_case(k1, B=2, S=8, D=32, H=4)

    # Multi-tile case: exercises head-group column blocks (dk=32, hpb=4),
    # multiple q/kv tiles (online-softmax accumulation across kv steps).
    _run_case(k2, B=2, S=512, D=256, H=8, ts=128, tq=128, tk=128)

    print("KERNEL_OK")
</pallas_src>

<mosaic_0001>
module attributes {stable_mosaic.version = 11 : i64} {
  func.func @_qkv_proj_kernel(%arg0: i32, %arg1: i32, %arg2: i32, %arg3: memref<1x8x32xf32, #tpu.memory_space<vmem>>, %arg4: memref<1x8x32xf32, #tpu.memory_space<vmem>>, %arg5: memref<1x8x32xf32, #tpu.memory_space<vmem>>, %arg6: memref<32x32xbf16, #tpu.memory_space<vmem>>, %arg7: memref<1x32xf32, #tpu.memory_space<vmem>>, %arg8: memref<32x32xbf16, #tpu.memory_space<vmem>>, %arg9: memref<1x32xf32, #tpu.memory_space<vmem>>, %arg10: memref<32x32xbf16, #tpu.memory_space<vmem>>, %arg11: memref<1x32xf32, #tpu.memory_space<vmem>>, %arg12: memref<1x8x32xbf16, #tpu.memory_space<vmem>>, %arg13: memref<1x8x32xbf16, #tpu.memory_space<vmem>>, %arg14: memref<1x8x32xbf16, #tpu.memory_space<vmem>>) attributes {dimension_semantics = [#tpu.dimension_semantics<parallel>, #tpu.dimension_semantics<parallel>, #tpu.dimension_semantics<parallel>], iteration_bounds = array<i64: 2, 1, 1>, scalar_prefetch = 0 : i64, scratch_operands = 0 : i64, tpu.core_type = #tpu.core_type<tc>, window_params = [{transform_indices = @transform_0, window_bounds = array<i64: 1, 8, 32>}, {transform_indices = @transform_1, window_bounds = array<i64: 1, 8, 32>}, {transform_indices = @transform_2, window_bounds = array<i64: 1, 8, 32>}, {transform_indices = @transform_3, window_bounds = array<i64: 32, 32>}, {transform_indices = @transform_4, window_bounds = array<i64: 1, 32>}, {transform_indices = @transform_5, window_bounds = array<i64: 32, 32>}, {transform_indices = @transform_6, window_bounds = array<i64: 1, 32>}, {transform_indices = @transform_7, window_bounds = array<i64: 32, 32>}, {transform_indices = @transform_8, window_bounds = array<i64: 1, 32>}, {transform_indices = @transform_9, window_bounds = array<i64: 1, 8, 32>}, {transform_indices = @transform_10, window_bounds = array<i64: 1, 8, 32>}, {transform_indices = @transform_11, window_bounds = array<i64: 1, 8, 32>}]} {
    %c0 = arith.constant 0 : index
    %c0_0 = arith.constant 0 : index
    %c0_1 = arith.constant 0 : index
    %0 = vector.load %arg3[%c0, %c0_0, %c0_1] : memref<1x8x32xf32, #tpu.memory_space<vmem>>, vector<1x8x32xf32>
    %1 = vector.shape_cast %0 : vector<1x8x32xf32> to vector<8x32xf32>
    %2 = arith.truncf %1 : vector<8x32xf32> to vector<8x32xbf16>
    %c0_2 = arith.constant 0 : index
    %c0_3 = arith.constant 0 : index
    %3 = vector.load %arg6[%c0_2, %c0_3] : memref<32x32xbf16, #tpu.memory_space<vmem>>, vector<32x32xbf16>
    %cst = arith.constant dense<0.000000e+00> : vector<8x32xf32>
    %4 = tpu.matmul %2, %3, %cst {dimension_numbers = #tpu.dot_dimension_numbers<[1], [0], [0], [1], [0, 0, 1, 1], [], []>} : vector<8x32xbf16>, vector<32x32xbf16>, vector<8x32xf32> -> vector<8x32xf32>
    %c0_4 = arith.constant 0 : index
    %c0_5 = arith.constant 0 : index
    %5 = vector.load %arg7[%c0_4, %c0_5] : memref<1x32xf32, #tpu.memory_space<vmem>>, vector<1x32xf32>
    %6 = vector.broadcast %5 : vector<1x32xf32> to vector<8x32xf32>
    %7 = arith.addf %4, %6 : vector<8x32xf32>
    %8 = arith.truncf %7 : vector<8x32xf32> to vector<8x32xbf16>
    %c0_6 = arith.constant 0 : index
    %c0_7 = arith.constant 0 : index
    %c0_8 = arith.constant 0 : index
    %9 = vector.load %arg12[%c0_6, %c0_7, %c0_8] : memref<1x8x32xbf16, #tpu.memory_space<vmem>>, vector<1x8x32xbf16>
    %10 = vector.shape_cast %9 : vector<1x8x32xbf16> to vector<8x32xbf16>
    %11 = vector.shape_cast %8 : vector<8x32xbf16> to vector<1x8x32xbf16>
    tpu.vector_store %arg12[%c0_6, %c0_7, %c0_8], %11 {strides = array<i32>} : memref<1x8x32xbf16, #tpu.memory_space<vmem>>, vector<1x8x32xbf16>,
    %c0_9 = arith.constant 0 : index
    %c0_10 = arith.constant 0 : index
    %c0_11 = arith.constant 0 : index
    %12 = vector.load %arg4[%c0_9, %c0_10, %c0_11] : memref<1x8x32xf32, #tpu.memory_space<vmem>>, vector<1x8x32xf32>
    %13 = vector.shape_cast %12 : vector<1x8x32xf32> to vector<8x32xf32>
    %14 = arith.truncf %13 : vector<8x32xf32> to vector<8x32xbf16>
    %c0_12 = arith.constant 0 : index
    %c0_13 = arith.constant 0 : index
    %15 = vector.load %arg8[%c0_12, %c0_13] : memref<32x32xbf16, #tpu.memory_space<vmem>>, vector<32x32xbf16>
    %cst_14 = arith.constant dense<0.000000e+00> : vector<8x32xf32>
    %16 = tpu.matmul %14, %15, %cst_14 {dimension_numbers = #tpu.dot_dimension_numbers<[1], [0], [0], [1], [0, 0, 1, 1], [], []>} : vector<8x32xbf16>, vector<32x32xbf16>, vector<8x32xf32> -> vector<8x32xf32>
    %c0_15 = arith.constant 0 : index
    %c0_16 = arith.constant 0 : index
    %17 = vector.load %arg9[%c0_15, %c0_16] : memref<1x32xf32, #tpu.memory_space<vmem>>, vector<1x32xf32>
    %18 = vector.broadcast %17 : vector<1x32xf32> to vector<8x32xf32>
    %19 = arith.addf %16, %18 : vector<8x32xf32>
    %20 = arith.truncf %19 : vector<8x32xf32> to vector<8x32xbf16>
    %c0_17 = arith.constant 0 : index
    %c0_18 = arith.constant 0 : index
    %c0_19 = arith.constant 0 : index
    %21 = vector.load %arg13[%c0_17, %c0_18, %c0_19] : memref<1x8x32xbf16, #tpu.memory_space<vmem>>, vector<1x8x32xbf16>
    %22 = vector.shape_cast %21 : vector<1x8x32xbf16> to vector<8x32xbf16>
    %23 = vector.shape_cast %20 : vector<8x32xbf16> to vector<1x8x32xbf16>
    tpu.vector_store %arg13[%c0_17, %c0_18, %c0_19], %23 {strides = array<i32>} : memref<1x8x32xbf16, #tpu.memory_space<vmem>>, vector<1x8x32xbf16>,
    %c0_20 = arith.constant 0 : index
    %c0_21 = arith.constant 0 : index
    %c0_22 = arith.constant 0 : index
    %24 = vector.load %arg5[%c0_20, %c0_21, %c0_22] : memref<1x8x32xf32, #tpu.memory_space<vmem>>, vector<1x8x32xf32>
    %25 = vector.shape_cast %24 : vector<1x8x32xf32> to vector<8x32xf32>
    %26 = arith.truncf %25 : vector<8x32xf32> to vector<8x32xbf16>
    %c0_23 = arith.constant 0 : index
    %c0_24 = arith.constant 0 : index
    %27 = vector.load %arg10[%c0_23, %c0_24] : memref<32x32xbf16, #tpu.memory_space<vmem>>, vector<32x32xbf16>
    %cst_25 = arith.constant dense<0.000000e+00> : vector<8x32xf32>
    %28 = tpu.matmul %26, %27, %cst_25 {dimension_numbers = #tpu.dot_dimension_numbers<[1], [0], [0], [1], [0, 0, 1, 1], [], []>} : vector<8x32xbf16>, vector<32x32xbf16>, vector<8x32xf32> -> vector<8x32xf32>
    %c0_26 = arith.constant 0 : index
    %c0_27 = arith.constant 0 : index
    %29 = vector.load %arg11[%c0_26, %c0_27] : memref<1x32xf32, #tpu.memory_space<vmem>>, vector<1x32xf32>
    %30 = vector.broadcast %29 : vector<1x32xf32> to vector<8x32xf32>
    %31 = arith.addf %28, %30 : vector<8x32xf32>
    %32 = arith.truncf %31 : vector<8x32xf32> to vector<8x32xbf16>
    %c0_28 = arith.constant 0 : index
    %c0_29 = arith.constant 0 : index
    %c0_30 = arith.constant 0 : index
    %33 = vector.load %arg14[%c0_28, %c0_29, %c0_30] : memref<1x8x32xbf16, #tpu.memory_space<vmem>>, vector<1x8x32xbf16>
    %34 = vector.shape_cast %33 : vector<1x8x32xbf16> to vector<8x32xbf16>
    %35 = vector.shape_cast %32 : vector<8x32xbf16> to vector<1x8x32xbf16>
    tpu.vector_store %arg14[%c0_28, %c0_29, %c0_30], %35 {strides = array<i32>} : memref<1x8x32xbf16, #tpu.memory_space<vmem>>, vector<1x8x32xbf16>,
    return
  }
  func.func @transform_0(%arg0: i32, %arg1: i32, %arg2: i32) -> (i32, i32, i32) {
    %c0_i32 = arith.constant 0 : i32
    %c0_i32_0 = arith.constant 0 : i32
    return %arg0, %arg2, %c0_i32 : i32, i32, i32
  }
  func.func @transform_1(%arg0: i32, %arg1: i32, %arg2: i32) -> (i32, i32, i32) {
    %c0_i32 = arith.constant 0 : i32
    %c0_i32_0 = arith.constant 0 : i32
    return %arg0, %arg2, %c0_i32 : i32, i32, i32
  }
  func.func @transform_2(%arg0: i32, %arg1: i32, %arg2: i32) -> (i32, i32, i32) {
    %c0_i32 = arith.constant 0 : i32
    %c0_i32_0 = arith.constant 0 : i32
    return %arg0, %arg2, %c0_i32 : i32, i32, i32
  }
  func.func @transform_3(%arg0: i32, %arg1: i32, %arg2: i32) -> (i32, i32) {
    %c0_i32 = arith.constant 0 : i32
    %c0_i32_0 = arith.constant 0 : i32
    return %c0_i32, %arg1 : i32, i32
  }
  func.func @transform_4(%arg0: i32, %arg1: i32, %arg2: i32) -> (i32, i32) {
    %c0_i32 = arith.constant 0 : i32
    %c0_i32_0 = arith.constant 0 : i32
    return %c0_i32, %arg1 : i32, i32
  }
  func.func @transform_5(%arg0: i32, %arg1: i32, %arg2: i32) -> (i32, i32) {
    %c0_i32 = arith.constant 0 : i32
    %c0_i32_0 = arith.constant 0 : i32
    return %c0_i32, %arg1 : i32, i32
  }
  func.func @transform_6(%arg0: i32, %arg1: i32, %arg2: i32) -> (i32, i32) {
    %c0_i32 = arith.constant 0 : i32
    %c0_i32_0 = arith.constant 0 : i32
    return %c0_i32, %arg1 : i32, i32
  }
  func.func @transform_7(%arg0: i32, %arg1: i32, %arg2: i32) -> (i32, i32) {
    %c0_i32 = arith.constant 0 : i32
    %c0_i32_0 = arith.constant 0 : i32
    return %c0_i32, %arg1 : i32, i32
  }
  func.func @transform_8(%arg0: i32, %arg1: i32, %arg2: i32) -> (i32, i32) {
    %c0_i32 = arith.constant 0 : i32
    %c0_i32_0 = arith.constant 0 : i32
    return %c0_i32, %arg1 : i32, i32
  }
  func.func @transform_9(%arg0: i32, %arg1: i32, %arg2: i32) -> (i32, i32, i32) {
    %c0_i32 = arith.constant 0 : i32
    return %arg0, %arg2, %arg1 : i32, i32, i32
  }
  func.func @transform_10(%arg0: i32, %arg1: i32, %arg2: i32) -> (i32, i32, i32) {
    %c0_i32 = arith.constant 0 : i32
    return %arg0, %arg2, %arg1 : i32, i32, i32
  }
  func.func @transform_11(%arg0: i32, %arg1: i32, %arg2: i32) -> (i32, i32, i32) {
    %c0_i32 = arith.constant 0 : i32
    return %arg0, %arg2, %arg1 : i32, i32, i32
  }
}

</mosaic_0001>

<llo_original>
// kernel: tpu_custom_call.1
$region0: #{tpu_custom_call.1}
  #allocation0 [shape = 'u32[]', space=smem, size = 0x4, offset = 0x4, fixed_abs, tag = 'smem constant byte address 0x4 - core index']
  #allocation1 [shape = 'u32[72,128]{1,0:T(1,128)}', space=vmem, size = 0x9000, scoped, tag = 'internal scratch']
  %s0 = inlined_call_operand.hbm [shape: f32[2,8,32], index: 0, kind: input, shape index: {}]
  %s1 = inlined_call_operand.hbm [shape: f32[2,8,32], index: 1, kind: input, shape index: {}]
  %s2 = inlined_call_operand.hbm [shape: f32[2,8,32], index: 2, kind: input, shape index: {}]
  %s3 = inlined_call_operand.hbm [shape: bf16[32,32], index: 3, kind: input, shape index: {}]
  %s4 = inlined_call_operand.vmem [shape: f32[1,32], index: 4, kind: input, shape index: {}]
  %s5 = inlined_call_operand.hbm [shape: bf16[32,32], index: 5, kind: input, shape index: {}]
  %s6 = inlined_call_operand.vmem [shape: f32[1,32], index: 6, kind: input, shape index: {}]
  %s7 = inlined_call_operand.hbm [shape: bf16[32,32], index: 7, kind: input, shape index: {}]
  %s8 = inlined_call_operand.vmem [shape: f32[1,32], index: 8, kind: input, shape index: {}]
  %s9 = inlined_call_operand.hbm [shape: bf16[2,8,32], index: 9, kind: output, shape index: {0}]
  %s10 = inlined_call_operand.hbm [shape: bf16[2,8,32], index: 10, kind: output, shape index: {1}]
  %s11 = inlined_call_operand.hbm [shape: bf16[2,8,32], index: 11, kind: output, shape index: {2}]
  %12 = xla_tuple %s9, %s10, %s11
  %s13 = sld [smem:[#allocation0]]
  $region109: #{tpu_custom_call.1} parent=0
    _
  %s15 = ssub.s32 1, %s13
  %s16 = scalar_select 0, %s15, %s13
  $region1: #{tpu_custom_call.1} parent=0
    #allocation2 [shape = 'u8[8192]{0}', space=vmem, size = 0x2000, scoped, tag = 'input window, operand 0']
    #allocation3 [shape = 's32[2]{0}', space=sflag, size = 0x8, scoped, tag = 'scoped memory for tpu_custom_call.1']
    #allocation4 [shape = 's32[2]{0}', space=sflag, size = 0x8, scoped, tag = 'scoped memory for tpu_custom_call.1']
    #allocation5 [shape = 'u8[8192]{0}', space=vmem, size = 0x2000, scoped, tag = 'input window, operand 1']
    #allocation6 [shape = 's32[2]{0}', space=sflag, size = 0x8, scoped, tag = 'scoped memory for tpu_custom_call.1']
    #allocation7 [shape = 'u8[8192]{0}', space=vmem, size = 0x2000, scoped, tag = 'input window, operand 2']
    #allocation8 [shape = 'u8[8192]{0}', space=vmem, size = 0x2000, scoped, tag = 'input window, operand 3, single buffered']
    #allocation9 [shape = 's32[1]{0}', space=sflag, size = 0x4, scoped, tag = 'scoped memory for tpu_custom_call.1']
    #allocation10 [shape = 'u8[8192]{0}', space=vmem, size = 0x2000, scoped, tag = 'input window, operand 5, single buffered']
    #allocation11 [shape = 'u8[8192]{0}', space=vmem, size = 0x2000, scoped, tag = 'input window, operand 7, single buffered']
    #allocation12 [shape = 's32[1]{0}', space=sflag, size = 0x4, scoped, tag = 'scoped memory for tpu_custom_call.1']
    #allocation13 [shape = 'u8[4096]{0}', space=vmem, size = 0x1000, scoped, tag = 'output window, operand 0']
    #allocation14 [shape = 'u8[4096]{0}', space=vmem, size = 0x1000, scoped, tag = 'output window, operand 1']
    #allocation15 [shape = 's32[2]{0}', space=sflag, size = 0x8, scoped, tag = 'scoped memory for tpu_custom_call.1']
    #allocation16 [shape = 'u8[4096]{0}', space=vmem, size = 0x1000, scoped, tag = 'output window, operand 2']
    %17 = vsyncpa [#allocation3], 0
    %s18 = scalar_lea.sflag [#allocation3], 1
    %19 = vsyncpa %s18, 0
    %20 = vsyncpa [#allocation6], 0
    %s21 = scalar_lea.sflag [#allocation6], 1
    %22 = vsyncpa %s21, 0
    %23 = vsyncpa [#allocation9], 0
    %24 = vsyncpa [#allocation12], 0
    %25 = vsyncpa [#allocation4], 0
    %s26 = scalar_lea.sflag [#allocation4], 1
    %27 = vsyncpa %s26, 0
    %28 = vsyncpa [#allocation15], 0
    %s29 = scalar_lea.sflag [#allocation15], 1
    %30 = vsyncpa %s29, 0
    loop: start=0, step=1, limit=4
    $region2: #{tpu_custom_call.1} parent=1 // loop_pre_header
      _
    $region3: #{tpu_custom_call.1} parent=1 // loop_header
      %s32 = sphi 0, %s36
      %p33 = scmp.ge.s32.totalorder %s32, 4
      %s39 = sphi 0, %s58
      %s40 = sphi 0, %s54
      %s41 = sphi 0, %s50
      %s42 = sphi 0, %s39
      %s43 = sphi 0, %s40
      %s44 = sphi 0, %s41
      %s45 = sphi 0, %s42
      %s46 = sphi 0, %s43
      %s47 = sphi 0, %s44
      %s63 = sphi 0, %s65
      %s66 = sphi 0, %s63
      %s67 = sphi 0, %s66
      %s83 = sphi 0, %s67
      %s91 = sphi 0, %s93
      %s94 = sphi 0, %s91
      %s95 = sphi 0, %s94
      %s111 = sphi 0, %s95
      %s119 = sphi 0, %s121
      %s122 = sphi 0, %s119
      %s123 = sphi 0, %s122
      %s139 = sphi 0, %s123
      %s145 = sphi 0, %s147
      %s148 = sphi 0, %s145
      %s149 = sphi 0, %s148
      %s165 = sphi 0, %s149
      %s171 = sphi 0, %s173
      %s174 = sphi 0, %s171
      %s175 = sphi 0, %s174
      %s191 = sphi 0, %s175
      %s197 = sphi 0, %s199
      %s200 = sphi 0, %s197
      %s201 = sphi 0, %s200
      %s217 = sphi 0, %s201
      %s223 = sphi 0, %s225
      %s226 = sphi 0, %s223
      %s227 = sphi 0, %s226
      %s243 = sphi 0, %s227
      %s249 = sphi 0, %s251
      %s252 = sphi 0, %s249
      %s253 = sphi 0, %s252
      %s269 = sphi 0, %s253
      %s275 = sphi 0, %s277
      %s278 = sphi 0, %s275
      %s279 = sphi 0, %s278
      %s295 = sphi 0, %s279
      %s305 = sphi 0, %s307
      %s308 = sphi 0, %s305
      %s309 = sphi 0, %s308
      %s325 = sphi 0, %s309
      %s335 = sphi 0, %s337
      %s338 = sphi 0, %s335
      %s339 = sphi 0, %s338
      %s355 = sphi 0, %s339
      %s365 = sphi 0, %s367
      %s368 = sphi 0, %s365
      %s369 = sphi 0, %s368
      %s385 = sphi 0, %s369
    $region4: #{tpu_custom_call.1} parent=1 // loop_header_branch
      %35 = sbr.rel (%p33) target = $region8
    $region5: #{tpu_custom_call.1} parent=1 // loop_body
      %s37 = ssub.s32 %s32, 1
      %s38 = ssub.s32 %s32, 2
      %s48 = sadd.s32 1, %s41
      %p49 = scmp.ge.s32.totalorder %s48, 1
      %s50 = scalar_select %p49, 0, %s48
      %s51 = sadd.s32 1, %s40
      %s52 = scalar_select %p49, %s51, %s40
      %p53 = scmp.ge.s32.totalorder %s52, 1
      %s54 = scalar_select %p53, 0, %s52
      %s55 = sadd.s32 1, %s39
      %s56 = scalar_select %p53, %s55, %s39
      %p57 = scmp.ge.s32.totalorder %s56, 2
      %s58 = scalar_select %p57, 0, %s56
      %s59 = ssub.s32 %s39, %s58
      %s60 = ssub.s32 %s41, %s50
      %s61 = sor.u32 %s59, %s60
      %p62 = scmp.eq.s32.totalorder %s61, 0
      %s64 = sadd.s32 %s63, 1
      %s65 = scalar_select %p62, %s63, %s64
      %p68 = pneg %p62
      %p69 = scmp.eq.s32.totalorder %s32, 1
      %p70 = por %p68, %p69
      %p71 = scmp.ne.s32.totalorder %s63, %s66
      %p72 = scmp.eq.s32.totalorder %s32, 0
      %p73 = por %p71, %p72
      %p74 = scmp.ne.s32.totalorder %s63, %s66
      %p75 = scmp.eq.s32.totalorder %s37, 1
      %p76 = por %p74, %p75
      %p77 = scmp.ne.s32.totalorder %s66, %s67
      %p78 = scmp.eq.s32.totalorder %s37, 0
      %p79 = por %p77, %p78
      %p80 = scmp.ne.s32.totalorder %s66, %s67
      %p81 = scmp.eq.s32.totalorder %s38, 1
      %p82 = por %p80, %p81
      %p84 = scmp.ne.s32.totalorder %s67, %s83
      %p85 = scmp.eq.s32.totalorder %s38, 0
      %p86 = por %p84, %p85
      %s87 = ssub.s32 %s39, %s58
      %s88 = ssub.s32 %s41, %s50
      %s89 = sor.u32 %s87, %s88
      %p90 = scmp.eq.s32.totalorder %s89, 0
      %s92 = sadd.s32 %s91, 1
      %s93 = scalar_select %p90, %s91, %s92
      %p96 = pneg %p90
      %p97 = scmp.eq.s32.totalorder %s32, 1
      %p98 = por %p96, %p97
      %p99 = scmp.ne.s32.totalorder %s91, %s94
      %p100 = scmp.eq.s32.totalorder %s32, 0
      %p101 = por %p99, %p100
      %p102 = scmp.ne.s32.totalorder %s91, %s94
      %p103 = scmp.eq.s32.totalorder %s37, 1
      %p104 = por %p102, %p103
      %p105 = scmp.ne.s32.totalorder %s94, %s95
      %p106 = scmp.eq.s32.totalorder %s37, 0
      %p107 = por %p105, %p106
      %p108 = scmp.ne.s32.totalorder %s94, %s95
      %p109 = scmp.eq.s32.totalorder %s38, 1
      %p110 = por %p108, %p109
      %p112 = scmp.ne.s32.totalorder %s95, %s111
      %p113 = scmp.eq.s32.totalorder %s38, 0
      %p114 = por %p112, %p113
      %s115 = ssub.s32 %s39, %s58
      %s116 = ssub.s32 %s41, %s50
      %s117 = sor.u32 %s115, %s116
      %p118 = scmp.eq.s32.totalorder %s117, 0
      %s120 = sadd.s32 %s119, 1
      %s121 = scalar_select %p118, %s119, %s120
      %p124 = pneg %p118
      %p125 = scmp.eq.s32.totalorder %s32, 1
      %p126 = por %p124, %p125
      %p127 = scmp.ne.s32.totalorder %s119, %s122
      %p128 = scmp.eq.s32.totalorder %s32, 0
      %p129 = por %p127, %p128
      %p130 = scmp.ne.s32.totalorder %s119, %s122
      %p131 = scmp.eq.s32.totalorder %s37, 1
      %p132 = por %p130, %p131
      %p133 = scmp.ne.s32.totalorder %s122, %s123
      %p134 = scmp.eq.s32.totalorder %s37, 0
      %p135 = por %p133, %p134
      %p136 = scmp.ne.s32.totalorder %s122, %s123
      %p137 = scmp.eq.s32.totalorder %s38, 1
      %p138 = por %p136, %p137
      %p140 = scmp.ne.s32.totalorder %s123, %s139
      %p141 = scmp.eq.s32.totalorder %s38, 0
      %p142 = por %p140, %p141
      %s143 = ssub.s32 %s40, %s54
      %p144 = scmp.eq.s32.totalorder %s143, 0
      %s146 = sadd.s32 %s145, 1
      %s147 = scalar_select %p144, %s145, %s146
      %p150 = pneg %p144
      %p151 = scmp.eq.s32.totalorder %s32, 1
      %p152 = por %p150, %p151
      %p153 = scmp.ne.s32.totalorder %s145, %s148
      %p154 = scmp.eq.s32.totalorder %s32, 0
      %p155 = por %p153, %p154
      %p156 = scmp.ne.s32.totalorder %s145, %s148
      %p157 = scmp.eq.s32.totalorder %s37, 1
      %p158 = por %p156, %p157
      %p159 = scmp.ne.s32.totalorder %s148, %s149
      %p160 = scmp.eq.s32.totalorder %s37, 0
      %p161 = por %p159, %p160
      %p162 = scmp.ne.s32.totalorder %s148, %s149
      %p163 = scmp.eq.s32.totalorder %s38, 1
      %p164 = por %p162, %p163
      %p166 = scmp.ne.s32.totalorder %s149, %s165
      %p167 = scmp.eq.s32.totalorder %s38, 0
      %p168 = por %p166, %p167
      %s169 = ssub.s32 %s40, %s54
      %p170 = scmp.eq.s32.totalorder %s169, 0
      %s172 = sadd.s32 %s171, 1
      %s173 = scalar_select %p170, %s171, %s172
      %p176 = pneg %p170
      %p177 = scmp.eq.s32.totalorder %s32, 1
      %p178 = por %p176, %p177
      %p179 = scmp.ne.s32.totalorder %s171, %s174
      %p180 = scmp.eq.s32.totalorder %s32, 0
      %p181 = por %p179, %p180
      %p182 = scmp.ne.s32.totalorder %s171, %s174
      %p183 = scmp.eq.s32.totalorder %s37, 1
      %p184 = por %p182, %p183
      %p185 = scmp.ne.s32.totalorder %s174, %s175
      %p186 = scmp.eq.s32.totalorder %s37, 0
      %p187 = por %p185, %p186
      %p188 = scmp.ne.s32.totalorder %s174, %s175
      %p189 = scmp.eq.s32.totalorder %s38, 1
      %p190 = por %p188, %p189
      %p192 = scmp.ne.s32.totalorder %s175, %s191
      %p193 = scmp.eq.s32.totalorder %s38, 0
      %p194 = por %p192, %p193
      %s195 = ssub.s32 %s40, %s54
      %p196 = scmp.eq.s32.totalorder %s195, 0
      %s198 = sadd.s32 %s197, 1
      %s199 = scalar_select %p196, %s197, %s198
      %p202 = pneg %p196
      %p203 = scmp.eq.s32.totalorder %s32, 1
      %p204 = por %p202, %p203
      %p205 = scmp.ne.s32.totalorder %s197, %s200
      %p206 = scmp.eq.s32.totalorder %s32, 0
      %p207 = por %p205, %p206
      %p208 = scmp.ne.s32.totalorder %s197, %s200
      %p209 = scmp.eq.s32.totalorder %s37, 1
      %p210 = por %p208, %p209
      %p211 = scmp.ne.s32.totalorder %s200, %s201
      %p212 = scmp.eq.s32.totalorder %s37, 0
      %p213 = por %p211, %p212
      %p214 = scmp.ne.s32.totalorder %s200, %s201
      %p215 = scmp.eq.s32.totalorder %s38, 1
      %p216 = por %p214, %p215
      %p218 = scmp.ne.s32.totalorder %s201, %s217
      %p219 = scmp.eq.s32.totalorder %s38, 0
      %p220 = por %p218, %p219
      %s221 = ssub.s32 %s40, %s54
      %p222 = scmp.eq.s32.totalorder %s221, 0
      %s224 = sadd.s32 %s223, 1
      %s225 = scalar_select %p222, %s223, %s224
      %p228 = pneg %p222
      %p229 = scmp.eq.s32.totalorder %s32, 1
      %p230 = por %p228, %p229
      %p231 = scmp.ne.s32.totalorder %s223, %s226
      %p232 = scmp.eq.s32.totalorder %s32, 0
      %p233 = por %p231, %p232
      %p234 = scmp.ne.s32.totalorder %s223, %s226
      %p235 = scmp.eq.s32.totalorder %s37, 1
      %p236 = por %p234, %p235
      %p237 = scmp.ne.s32.totalorder %s226, %s227
      %p238 = scmp.eq.s32.totalorder %s37, 0
      %p239 = por %p237, %p238
      %p240 = scmp.ne.s32.totalorder %s226, %s227
      %p241 = scmp.eq.s32.totalorder %s38, 1
      %p242 = por %p240, %p241
      %p244 = scmp.ne.s32.totalorder %s227, %s243
      %p245 = scmp.eq.s32.totalorder %s38, 0
      %p246 = por %p244, %p245
      %s247 = ssub.s32 %s40, %s54
      %p248 = scmp.eq.s32.totalorder %s247, 0
      %s250 = sadd.s32 %s249, 1
      %s251 = scalar_select %p248, %s249, %s250
      %p254 = pneg %p248
      %p255 = scmp.eq.s32.totalorder %s32, 1
      %p256 = por %p254, %p255
      %p257 = scmp.ne.s32.totalorder %s249, %s252
      %p258 = scmp.eq.s32.totalorder %s32, 0
      %p259 = por %p257, %p258
      %p260 = scmp.ne.s32.totalorder %s249, %s252
      %p261 = scmp.eq.s32.totalorder %s37, 1
      %p262 = por %p260, %p261
      %p263 = scmp.ne.s32.totalorder %s252, %s253
      %p264 = scmp.eq.s32.totalorder %s37, 0
      %p265 = por %p263, %p264
      %p266 = scmp.ne.s32.totalorder %s252, %s253
      %p267 = scmp.eq.s32.totalorder %s38, 1
      %p268 = por %p266, %p267
      %p270 = scmp.ne.s32.totalorder %s253, %s269
      %p271 = scmp.eq.s32.totalorder %s38, 0
      %p272 = por %p270, %p271
      %s273 = ssub.s32 %s40, %s54
      %p274 = scmp.eq.s32.totalorder %s273, 0
      %s276 = sadd.s32 %s275, 1
      %s277 = scalar_select %p274, %s275, %s276
      %p280 = pneg %p274
      %p281 = scmp.eq.s32.totalorder %s32, 1
      %p282 = por %p280, %p281
      %p283 = scmp.ne.s32.totalorder %s275, %s278
      %p284 = scmp.eq.s32.totalorder %s32, 0
      %p285 = por %p283, %p284
      %p286 = scmp.ne.s32.totalorder %s275, %s278
      %p287 = scmp.eq.s32.totalorder %s37, 1
      %p288 = por %p286, %p287
      %p289 = scmp.ne.s32.totalorder %s278, %s279
      %p290 = scmp.eq.s32.totalorder %s37, 0
      %p291 = por %p289, %p290
      %p292 = scmp.ne.s32.totalorder %s278, %s279
      %p293 = scmp.eq.s32.totalorder %s38, 1
      %p294 = por %p292, %p293
      %p296 = scmp.ne.s32.totalorder %s279, %s295
      %p297 = scmp.eq.s32.totalorder %s38, 0
      %p298 = por %p296, %p297
      %s299 = ssub.s32 %s39, %s58
      %s300 = ssub.s32 %s41, %s50
      %s301 = sor.u32 %s299, %s300
      %s302 = ssub.s32 %s40, %s54
      %s303 = sor.u32 %s301, %s302
      %p304 = scmp.eq.s32.totalorder %s303, 0
      %s306 = sadd.s32 %s305, 1
      %s307 = scalar_select %p304, %s305, %s306
      %p310 = pneg %p304
      %p311 = scmp.eq.s32.totalorder %s32, 1
      %p312 = por %p310, %p311
      %p313 = scmp.ne.s32.totalorder %s305, %s308
      %p314 = scmp.eq.s32.totalorder %s32, 0
      %p315 = por %p313, %p314
      %p316 = scmp.ne.s32.totalorder %s305, %s308
      %p317 = scmp.eq.s32.totalorder %s37, 1
      %p318 = por %p316, %p317
      %p319 = scmp.ne.s32.totalorder %s308, %s309
      %p320 = scmp.eq.s32.totalorder %s37, 0
      %p321 = por %p319, %p320
      %p322 = scmp.ne.s32.totalorder %s308, %s309
      %p323 = scmp.eq.s32.totalorder %s38, 1
      %p324 = por %p322, %p323
      %p326 = scmp.ne.s32.totalorder %s309, %s325
      %p327 = scmp.eq.s32.totalorder %s38, 0
      %p328 = por %p326, %p327
      %s329 = ssub.s32 %s39, %s58
      %s330 = ssub.s32 %s41, %s50
      %s331 = sor.u32 %s329, %s330
      %s332 = ssub.s32 %s40, %s54
      %s333 = sor.u32 %s331, %s332
      %p334 = scmp.eq.s32.totalorder %s333, 0
      %s336 = sadd.s32 %s335, 1
      %s337 = scalar_select %p334, %s335, %s336
      %p340 = pneg %p334
      %p341 = scmp.eq.s32.totalorder %s32, 1
      %p342 = por %p340, %p341
      %p343 = scmp.ne.s32.totalorder %s335, %s338
      %p344 = scmp.eq.s32.totalorder %s32, 0
      %p345 = por %p343, %p344
      %p346 = scmp.ne.s32.totalorder %s335, %s338
      %p347 = scmp.eq.s32.totalorder %s37, 1
      %p348 = por %p346, %p347
      %p349 = scmp.ne.s32.totalorder %s338, %s339
      %p350 = scmp.eq.s32.totalorder %s37, 0
      %p351 = por %p349, %p350
      %p352 = scmp.ne.s32.totalorder %s338, %s339
      %p353 = scmp.eq.s32.totalorder %s38, 1
      %p354 = por %p352, %p353
      %p356 = scmp.ne.s32.totalorder %s339, %s355
      %p357 = scmp.eq.s32.totalorder %s38, 0
      %p358 = por %p356, %p357
      %s359 = ssub.s32 %s39, %s58
      %s360 = ssub.s32 %s41, %s50
      %s361 = sor.u32 %s359, %s360
      %s362 = ssub.s32 %s40, %s54
      %s363 = sor.u32 %s361, %s362
      %p364 = scmp.eq.s32.totalorder %s363, 0
      %s366 = sadd.s32 %s365, 1
      %s367 = scalar_select %p364, %s365, %s366
      %p370 = pneg %p364
      %p371 = scmp.eq.s32.totalorder %s32, 1
      %p372 = por %p370, %p371
      %p373 = scmp.ne.s32.totalorder %s365, %s368
      %p374 = scmp.eq.s32.totalorder %s32, 0
      %p375 = por %p373, %p374
      %p376 = scmp.ne.s32.totalorder %s365, %s368
      %p377 = scmp.eq.s32.totalorder %s37, 1
      %p378 = por %p376, %p377
      %p379 = scmp.ne.s32.totalorder %s368, %s369
      %p380 = scmp.eq.s32.totalorder %s37, 0
      %p381 = por %p379, %p380
      %p382 = scmp.ne.s32.totalorder %s368, %s369
      %p383 = scmp.eq.s32.totalorder %s38, 1
      %p384 = por %p382, %p383
      %p386 = scmp.ne.s32.totalorder %s369, %s385
      %p387 = scmp.eq.s32.totalorder %s38, 0
      %p388 = por %p386, %p387
      %p389 = scmp.le.s32.totalorder 1, %s32
      %p390 = scmp.lt.s32.totalorder %s32, 3
      %p391 = pnand %p389, %p390
      %p392 = pneg %p391
      // Predicated region
      $region9: #{tpu_custom_call.1} parent=5 // pred_check
        _
      $region10: #{tpu_custom_call.1} parent=5 // pred_check_branch
        %394 = sbr.rel (%p391) target = $region12
      $region11: #{tpu_custom_call.1} parent=5 // pred_region
        %s395 = ssub.s32 %s32, 1
        // Predicated region
        $region13: #{tpu_custom_call.1} parent=11 // pred_check
          %p396 = pneg %p161
        $region14: #{tpu_custom_call.1} parent=11 // pred_check_branch
          %398 = sbr.rel (%p396) target = $region16
        $region15: #{tpu_custom_call.1} parent=11 // pred_region
          %400 = vsyncadd [#allocation9], 0
          %s401 = smul.addr %s43, 4
          %s402 = scalar_lea.hbm %s3, %s401
          %s403 = sshll.u32 %s402, 4
          %s404 = int_to_ptr.hbm [resolvable:$true] %s403
          %s405 = sshll.u32 [#allocation8], 4
          %s406 = int_to_ptr.vmem [resolvable:$true] %s405
          %411 = dma.hbm_to_vmem [thread:$0]  %s404, 256, %s406, [#allocation9], 64, 64, 4
        $region16: #{tpu_custom_call.1} parent=11 // pred_fallthru
          _
        // Predicated region
        $region17: #{tpu_custom_call.1} parent=11 // pred_check
          %p412 = pneg %p187
        $region18: #{tpu_custom_call.1} parent=11 // pred_check_branch
          %414 = sbr.rel (%p412) target = $region20
        $region19: #{tpu_custom_call.1} parent=11 // pred_region
          %p415 = scmp.lt.s32.totalorder %s43, 0
          %s416 = scalar_select %p415, %s43, 0
          %s417 = scalar_lea.vmem %s4, %s416
        $region20: #{tpu_custom_call.1} parent=11 // pred_fallthru
          _
        // Predicated region
        $region21: #{tpu_custom_call.1} parent=11 // pred_check
          %p418 = pneg %p213
        $region22: #{tpu_custom_call.1} parent=11 // pred_check_branch
          %420 = sbr.rel (%p418) target = $region24
        $region23: #{tpu_custom_call.1} parent=11 // pred_region
          %422 = vsyncadd [#allocation9], 0
          %s423 = smul.addr %s43, 4
          %s424 = scalar_lea.hbm %s5, %s423
          %s425 = sshll.u32 %s424, 4
          %s426 = int_to_ptr.hbm [resolvable:$true] %s425
          %s427 = sshll.u32 [#allocation10], 4
          %s428 = int_to_ptr.vmem [resolvable:$true] %s427
          %433 = dma.hbm_to_vmem [thread:$0]  %s426, 256, %s428, [#allocation9], 64, 64, 4
        $region24: #{tpu_custom_call.1} parent=11 // pred_fallthru
          _
        // Predicated region
        $region25: #{tpu_custom_call.1} parent=11 // pred_check
          %p434 = pneg %p239
        $region26: #{tpu_custom_call.1} parent=11 // pred_check_branch
          %436 = sbr.rel (%p434) target = $region28
        $region27: #{tpu_custom_call.1} parent=11 // pred_region
          %p437 = scmp.lt.s32.totalorder %s43, 0
          %s438 = scalar_select %p437, %s43, 0
          %s439 = scalar_lea.vmem %s6, %s438
        $region28: #{tpu_custom_call.1} parent=11 // pred_fallthru
          _
        // Predicated region
        $region29: #{tpu_custom_call.1} parent=11 // pred_check
          %p440 = pneg %p265
        $region30: #{tpu_custom_call.1} parent=11 // pred_check_branch
          %442 = sbr.rel (%p440) target = $region32
        $region31: #{tpu_custom_call.1} parent=11 // pred_region
          %444 = vsyncadd [#allocation12], 0
          %s445 = smul.addr %s43, 4
          %s446 = scalar_lea.hbm %s7, %s445
          %s447 = sshll.u32 %s446, 4
          %s448 = int_to_ptr.hbm [resolvable:$true] %s447
          %s449 = sshll.u32 [#allocation11], 4
          %s450 = int_to_ptr.vmem [resolvable:$true] %s449
          %455 = dma.hbm_to_vmem [thread:$0]  %s448, 256, %s450, [#allocation12], 64, 64, 4
        $region32: #{tpu_custom_call.1} parent=11 // pred_fallthru
          _
        // Predicated region
        $region33: #{tpu_custom_call.1} parent=11 // pred_check
          %p456 = pneg %p291
        $region34: #{tpu_custom_call.1} parent=11 // pred_check_branch
          %458 = sbr.rel (%p456) target = $region36
        $region35: #{tpu_custom_call.1} parent=11 // pred_region
          %p459 = scmp.lt.s32.totalorder %s43, 0
          %s460 = scalar_select %p459, %s43, 0
          %s461 = scalar_lea.vmem %s8, %s460
        $region36: #{tpu_custom_call.1} parent=11 // pred_fallthru
          _
      $region12: #{tpu_custom_call.1} parent=5 // pred_fallthru
        _
      %p462 = scmp.lt.s32.totalorder %s32, 2
      // Predicated region
      $region37: #{tpu_custom_call.1} parent=5 // pred_check
        %p463 = pneg %p462
      $region38: #{tpu_custom_call.1} parent=5 // pred_check_branch
        %465 = sbr.rel (%p463) target = $region40
      $region39: #{tpu_custom_call.1} parent=5 // pred_region
        // Predicated region
        $region41: #{tpu_custom_call.1} parent=39 // pred_check
          %p466 = pneg %p73
        $region42: #{tpu_custom_call.1} parent=39 // pred_check_branch
          %468 = sbr.rel (%p466) target = $region44
        $region43: #{tpu_custom_call.1} parent=39 // pred_region
          %s469 = sand.u32 %s63, 1
          %s470 = scalar_lea.sflag [#allocation3], %s469
          %s471 = sand.u32 %s63, 1
          %s472 = smul.addr %s471, 8
          %s473 = scalar_lea.vmem [#allocation2], %s472
          %475 = vsyncadd %s470, 0
          %s476 = sadd.s32 %s41, %s39
          %s477 = smul.addr %s476, 8
          %s478 = scalar_lea.hbm %s0, %s477
          %s480 = sshll.u32 %s478, 4
          %s481 = int_to_ptr.hbm [resolvable:$true] %s480
          %s482 = sshll.u32 %s473, 4
          %s483 = int_to_ptr.vmem [resolvable:$true] %s482
          %485 = dma.hbm_to_vmem [thread:$0]  %s481, 128, %s483, %s470
        $region44: #{tpu_custom_call.1} parent=39 // pred_fallthru
          _
        // Predicated region
        $region45: #{tpu_custom_call.1} parent=39 // pred_check
          %p486 = pneg %p101
        $region46: #{tpu_custom_call.1} parent=39 // pred_check_branch
          %488 = sbr.rel (%p486) target = $region48
        $region47: #{tpu_custom_call.1} parent=39 // pred_region
          %s489 = sand.u32 %s32, 1
          %s490 = scalar_lea.sflag [#allocation6], %s489
          %s491 = sand.u32 %s91, 1
          %s492 = smul.addr %s491, 8
          %s493 = scalar_lea.vmem [#allocation5], %s492
          %495 = vsyncadd %s490, 0
          %s496 = sadd.s32 %s41, %s39
          %s497 = smul.addr %s496, 8
          %s498 = scalar_lea.hbm %s1, %s497
          %s500 = sshll.u32 %s498, 4
          %s501 = int_to_ptr.hbm [resolvable:$true] %s500
          %s502 = sshll.u32 %s493, 4
          %s503 = int_to_ptr.vmem [resolvable:$true] %s502
          %505 = dma.hbm_to_vmem [thread:$0]  %s501, 128, %s503, %s490
        $region48: #{tpu_custom_call.1} parent=39 // pred_fallthru
          _
        // Predicated region
        $region49: #{tpu_custom_call.1} parent=39 // pred_check
          %p506 = pneg %p129
        $region50: #{tpu_custom_call.1} parent=39 // pred_check_branch
          %508 = sbr.rel (%p506) target = $region52
        $region51: #{tpu_custom_call.1} parent=39 // pred_region
          %s509 = sand.u32 %s32, 1
          %s510 = scalar_lea.sflag [#allocation6], %s509
          %s511 = sand.u32 %s119, 1
          %s512 = smul.addr %s511, 8
          %s513 = scalar_lea.vmem [#allocation7], %s512
          %515 = vsyncadd %s510, 0
          %s516 = sadd.s32 %s41, %s39
          %s517 = smul.addr %s516, 8
          %s518 = scalar_lea.hbm %s2, %s517
          %s520 = sshll.u32 %s518, 4
          %s521 = int_to_ptr.hbm [resolvable:$true] %s520
          %s522 = sshll.u32 %s513, 4
          %s523 = int_to_ptr.vmem [resolvable:$true] %s522
          %525 = dma.hbm_to_vmem [thread:$0]  %s521, 128, %s523, %s510
        $region52: #{tpu_custom_call.1} parent=39 // pred_fallthru
          _
      $region40: #{tpu_custom_call.1} parent=5 // pred_fallthru
        _
      %p526 = scmp.le.s32.totalorder 1, %s32
      %p527 = scmp.lt.s32.totalorder %s32, 3
      %p528 = pnand %p526, %p527
      %p529 = pneg %p528
      // Predicated region
      $region53: #{tpu_custom_call.1} parent=5 // pred_check
        _
      $region54: #{tpu_custom_call.1} parent=5 // pred_check_branch
        %531 = sbr.rel (%p528) target = $region56
      $region55: #{tpu_custom_call.1} parent=5 // pred_region
        %s532 = ssub.s32 %s32, 1
        %s533 = sand.u32 %s66, 1
        %s534 = scalar_lea.sflag [#allocation3], %s533
        %s535 = sand.u32 %s66, 1
        %s536 = smul.addr %s535, 8
        %s537 = scalar_lea.vmem [#allocation2], %s536
        // Predicated region
        $region57: #{tpu_custom_call.1} parent=55 // pred_check
          %p538 = pneg %p79
        $region58: #{tpu_custom_call.1} parent=55 // pred_check_branch
          %540 = sbr.rel (%p538) target = $region60
        $region59: #{tpu_custom_call.1} parent=55 // pred_region
          %542 = dma.done %s534, 128
        $region60: #{tpu_custom_call.1} parent=55 // pred_fallthru
          _
        %s543 = sand.u32 %s37, 1
        %s544 = scalar_lea.sflag [#allocation6], %s543
        %s545 = sand.u32 %s94, 1
        %s546 = smul.addr %s545, 8
        %s547 = scalar_lea.vmem [#allocation5], %s546
        // Predicated region
        $region61: #{tpu_custom_call.1} parent=55 // pred_check
          %p548 = pneg %p107
        $region62: #{tpu_custom_call.1} parent=55 // pred_check_branch
          %550 = sbr.rel (%p548) target = $region64
        $region63: #{tpu_custom_call.1} parent=55 // pred_region
          %552 = dma.done %s544, 128
        $region64: #{tpu_custom_call.1} parent=55 // pred_fallthru
          _
        %s553 = sand.u32 %s37, 1
        %s554 = scalar_lea.sflag [#allocation6], %s553
        %s555 = sand.u32 %s122, 1
        %s556 = smul.addr %s555, 8
        %s557 = scalar_lea.vmem [#allocation7], %s556
        // Predicated region
        $region65: #{tpu_custom_call.1} parent=55 // pred_check
          %p558 = pneg %p135
        $region66: #{tpu_custom_call.1} parent=55 // pred_check_branch
          %560 = sbr.rel (%p558) target = $region68
        $region67: #{tpu_custom_call.1} parent=55 // pred_region
          %562 = dma.done %s554, 128
        $region68: #{tpu_custom_call.1} parent=55 // pred_fallthru
          _
        // Predicated region
        $region69: #{tpu_custom_call.1} parent=55 // pred_check
          %p563 = pneg %p161
        $region70: #{tpu_custom_call.1} parent=55 // pred_check_branch
          %565 = sbr.rel (%p563) target = $region72
        $region71: #{tpu_custom_call.1} parent=55 // pred_region
          %567 = dma.done [#allocation9], 256
        $region72: #{tpu_custom_call.1} parent=55 // pred_fallthru
          _
        // Predicated region
        $region73: #{tpu_custom_call.1} parent=55 // pred_check
          %p568 = pneg %p213
        $region74: #{tpu_custom_call.1} parent=55 // pred_check_branch
          %570 = sbr.rel (%p568) target = $region76
        $region75: #{tpu_custom_call.1} parent=55 // pred_region
          %572 = dma.done [#allocation9], 256
        $region76: #{tpu_custom_call.1} parent=55 // pred_fallthru
          _
        // Predicated region
        $region77: #{tpu_custom_call.1} parent=55 // pred_check
          %p573 = pneg %p265
        $region78: #{tpu_custom_call.1} parent=55 // pred_check_branch
          %575 = sbr.rel (%p573) target = $region80
        $region79: #{tpu_custom_call.1} parent=55 // pred_region
          %577 = dma.done [#allocation12], 256
        $region80: #{tpu_custom_call.1} parent=55 // pred_fallthru
          _
        %s578 = sand.u32 %s66, 1
        %s579 = scalar_lea.sflag [#allocation3], %s578
        %s580 = sand.u32 %s66, 1
        %s581 = smul.addr %s580, 8
        %s582 = scalar_lea.vmem [#allocation2], %s581
        %p583 = pneg %p79
        %p584 = pneg %p76
        %s585 = sand.u32 %s37, 1
        %s586 = scalar_lea.sflag [#allocation6], %s585
        %s587 = sand.u32 %s94, 1
        %s588 = smul.addr %s587, 8
        %s589 = scalar_lea.vmem [#allocation5], %s588
        %p590 = pneg %p107
        %p591 = pneg %p104
        %s592 = sand.u32 %s37, 1
        %s593 = scalar_lea.sflag [#allocation6], %s592
        %s594 = sand.u32 %s122, 1
        %s595 = smul.addr %s594, 8
        %s596 = scalar_lea.vmem [#allocation7], %s595
        %p597 = pneg %p135
        %p598 = pneg %p132
        %p599 = pneg %p161
        %p600 = pneg %p158
        %p601 = scmp.lt.s32.totalorder %s43, 0
        %s602 = scalar_select %p601, %s43, 0
        %s603 = scalar_lea.vmem %s4, %s602
        %p604 = pneg %p187
        %p605 = pneg %p184
        %p606 = pneg %p213
        %p607 = pneg %p210
        %p608 = scmp.lt.s32.totalorder %s43, 0
        %s609 = scalar_select %p608, %s43, 0
        %s610 = scalar_lea.vmem %s6, %s609
        %p611 = pneg %p239
        %p612 = pneg %p236
        %p613 = pneg %p265
        %p614 = pneg %p262
        %p615 = scmp.lt.s32.totalorder %s43, 0
        %s616 = scalar_select %p615, %s43, 0
        %s617 = scalar_lea.vmem %s8, %s616
        %p618 = pneg %p291
        %p619 = pneg %p288
        %p620 = pneg %p321
        %p621 = pneg %p318
        %s622 = sand.u32 %s308, 1
        %s623 = scalar_lea.sflag [#allocation4], %s622
        %s624 = sand.u32 %s308, 1
        %s625 = smul.addr %s624, 4
        %s626 = scalar_lea.vmem [#allocation13], %s625
        %p627 = pneg %p351
        %p628 = pneg %p348
        %s629 = sand.u32 %s37, 1
        %s630 = scalar_lea.sflag [#allocation15], %s629
        %s631 = sand.u32 %s338, 1
        %s632 = smul.addr %s631, 4
        %s633 = scalar_lea.vmem [#allocation14], %s632
        %p634 = pneg %p381
        %p635 = pneg %p378
        %s636 = sand.u32 %s37, 1
        %s637 = scalar_lea.sflag [#allocation15], %s636
        %s638 = sand.u32 %s368, 1
        %s639 = smul.addr %s638, 4
        %s640 = scalar_lea.vmem [#allocation16], %s639
        %p641 = scmp.lt.s32.totalorder %s43, 0
        %s642 = scalar_select %p641, %s43, 0
        %s643 = scalar_lea.vmem %s4, %s642
        %p644 = scmp.lt.s32.totalorder %s43, 0
        %s645 = scalar_select %p644, %s43, 0
        %s646 = scalar_lea.vmem %s6, %s645
        %p647 = scmp.lt.s32.totalorder %s43, 0
        %s648 = scalar_select %p647, %s43, 0
        %s649 = scalar_lea.vmem %s8, %s648
        %v651 = vld [vmem:[%s537] sm:$0xff]
        %v652 = vpack.c.bf16 %v651, %v651
        %v653 = vld [vmem:[#allocation8] sm:$0xf]
        %v654 = vld [vmem:[#allocation8 + $0x4] sm:$0xf]
        %v655 = vld [vmem:[#allocation8 + $0x8] sm:$0xf]
        %v656 = vld [vmem:[#allocation8 + $0xc] sm:$0xf]
        %v657 = vld [vmem:[%s643] sm:$0x1]
        %v659 = vperm.slane %v657, 0
        %v665 = vunpack.c.l.b16 %v653
        %v666 = vunpack.c.l.b16 %v654
        %v667 = vunpack.c.l.b16 %v655
        %v668 = vunpack.c.l.b16 %v656
        %v669 = vpack.c.b16 %v666, %v665
        %v670 = vpack.c.b16 %v668, %v667
        %vm673 = vcmask 261120
        %v675 = vsel %vm673, %v652, 0
        %677 = vmatpush.bf16.msra.mxu0 0
        %678 = vmatpush.bf16.msra.mxu0 0
        %679 = vmatpush.bf16.msra.mxu0 0
        %680 = vmatpush.bf16.msra.mxu0 0
        %681 = vmatpush.bf16.msra.mxu0 0
        %682 = vmatpush.bf16.msra.mxu0 0
        %683 = vmatpush.bf16.msra.mxu0 %v670
        %684 = vmatpush.bf16.msra.mxu0 %v669
        %685 = vmatmul.bf16.gmra.mxu0 %v675
        %v686 = vpop.f32.mrf.mxu0
        %v687 = vadd.f32 %v659, %v686
        %v688 = vpop.f32.mrf.mxu0
        %689 = vdwg.mxu0
        %v690 = vpack.c.bf16 %v687, %v687
        %vm691 = vcmask 257024
        %692 = vst.msk [vmem:[%s626] sm:$0xf] %vm691, %v690
        %v693 = vld [vmem:[%s547] sm:$0xff]
        %v694 = vpack.c.bf16 %v693, %v693
        %v695 = vld [vmem:[#allocation10] sm:$0xf]
        %v696 = vld [vmem:[#allocation10 + $0x4] sm:$0xf]
        %v697 = vld [vmem:[#allocation10 + $0x8] sm:$0xf]
        %v698 = vld [vmem:[#allocation10 + $0xc] sm:$0xf]
        %v699 = vld [vmem:[%s646] sm:$0x1]
        %v701 = vperm.slane %v699, 0
        %v707 = vunpack.c.l.b16 %v695
        %v708 = vunpack.c.l.b16 %v696
        %v709 = vunpack.c.l.b16 %v697
        %v710 = vunpack.c.l.b16 %v698
        %v711 = vpack.c.b16 %v708, %v707
        %v712 = vpack.c.b16 %v710, %v709
        %v716 = vsel %vm673, %v694, 0
        %718 = vmatpush.bf16.msra.mxu0 0
        %719 = vmatpush.bf16.msra.mxu0 0
        %720 = vmatpush.bf16.msra.mxu0 0
        %721 = vmatpush.bf16.msra.mxu0 0
        %722 = vmatpush.bf16.msra.mxu0 0
        %723 = vmatpush.bf16.msra.mxu0 0
        %724 = vmatpush.bf16.msra.mxu0 %v712
        %725 = vmatpush.bf16.msra.mxu0 %v711
        %726 = vmatmul.bf16.gmra.mxu0 %v716
        %v727 = vpop.f32.mrf.mxu0
        %v728 = vadd.f32 %v701, %v727
        %v729 = vpop.f32.mrf.mxu0
        %730 = vdwg.mxu0
        %v731 = vpack.c.bf16 %v728, %v728
        %732 = vst.msk [vmem:[%s633] sm:$0xf] %vm691, %v731
        %v733 = vld [vmem:[%s557] sm:$0xff]
        %v734 = vpack.c.bf16 %v733, %v733
        %v735 = vld [vmem:[#allocation11] sm:$0xf]
        %v736 = vld [vmem:[#allocation11 + $0x4] sm:$0xf]
        %v737 = vld [vmem:[#allocation11 + $0x8] sm:$0xf]
        %v738 = vld [vmem:[#allocation11 + $0xc] sm:$0xf]
        %v739 = vld [vmem:[%s649] sm:$0x1]
        %v741 = vperm.slane %v739, 0
        %v747 = vunpack.c.l.b16 %v735
        %v748 = vunpack.c.l.b16 %v736
        %v749 = vunpack.c.l.b16 %v737
        %v750 = vunpack.c.l.b16 %v738
        %v751 = vpack.c.b16 %v748, %v747
        %v752 = vpack.c.b16 %v750, %v749
        %v756 = vsel %vm673, %v734, 0
        %758 = vmatpush.bf16.msra.mxu0 0
        %759 = vmatpush.bf16.msra.mxu0 0
        %760 = vmatpush.bf16.msra.mxu0 0
        %761 = vmatpush.bf16.msra.mxu0 0
        %762 = vmatpush.bf16.msra.mxu0 0
        %763 = vmatpush.bf16.msra.mxu0 0
        %764 = vmatpush.bf16.msra.mxu0 %v752
        %765 = vmatpush.bf16.msra.mxu0 %v751
        %766 = vmatmul.bf16.gmra.mxu0 %v756
        %v767 = vpop.f32.mrf.mxu0
        %v768 = vadd.f32 %v741, %v767
        %v769 = vpop.f32.mrf.mxu0
        %770 = vdwg.mxu0
        %v771 = vpack.c.bf16 %v768, %v768
        %772 = vst.msk [vmem:[%s640] sm:$0xf] %vm691, %v771
        %s773 = sand.u32 %s308, 1
        %s774 = scalar_lea.sflag [#allocation4], %s773
        %s775 = sand.u32 %s308, 1
        %s776 = smul.addr %s775, 4
        %s777 = scalar_lea.vmem [#allocation13], %s776
        %s778 = sand.u32 %s37, 1
        %s779 = scalar_lea.sflag [#allocation15], %s778
        %s780 = sand.u32 %s338, 1
        %s781 = smul.addr %s780, 4
        %s782 = scalar_lea.vmem [#allocation14], %s781
        %s783 = sand.u32 %s37, 1
        %s784 = scalar_lea.sflag [#allocation15], %s783
        %s785 = sand.u32 %s368, 1
        %s786 = smul.addr %s785, 4
        %s787 = scalar_lea.vmem [#allocation16], %s786
        // Predicated region
        $region81: #{tpu_custom_call.1} parent=55 // pred_check
          %p788 = pneg %p318
        $region82: #{tpu_custom_call.1} parent=55 // pred_check_branch
          %790 = sbr.rel (%p788) target = $region84
        $region83: #{tpu_custom_call.1} parent=55 // pred_region
          %792 = vsyncadd %s774, 0
          %s793 = sadd.s32 %s43, %s44
          %s794 = sadd.s32 %s793, %s42
          %s795 = smul.addr %s794, 4
          %s796 = scalar_lea.hbm %s9, %s795
          %s798 = sshll.u32 %s777, 4
          %s799 = int_to_ptr.vmem [resolvable:$true] %s798
          %s800 = sshll.u32 %s796, 4
          %s801 = int_to_ptr.hbm [resolvable:$true] %s800
          %803 = dma.vmem_to_hbm [thread:$0]  %s799, 64, %s801, %s774
        $region84: #{tpu_custom_call.1} parent=55 // pred_fallthru
          _
        // Predicated region
        $region85: #{tpu_custom_call.1} parent=55 // pred_check
          %p804 = pneg %p348
        $region86: #{tpu_custom_call.1} parent=55 // pred_check_branch
          %806 = sbr.rel (%p804) target = $region88
        $region87: #{tpu_custom_call.1} parent=55 // pred_region
          %808 = vsyncadd %s779, 0
          %s809 = sadd.s32 %s43, %s44
          %s810 = sadd.s32 %s809, %s42
          %s811 = smul.addr %s810, 4
          %s812 = scalar_lea.hbm %s10, %s811
          %s814 = sshll.u32 %s782, 4
          %s815 = int_to_ptr.vmem [resolvable:$true] %s814
          %s816 = sshll.u32 %s812, 4
          %s817 = int_to_ptr.hbm [resolvable:$true] %s816
          %819 = dma.vmem_to_hbm [thread:$0]  %s815, 64, %s817, %s779
        $region88: #{tpu_custom_call.1} parent=55 // pred_fallthru
          _
        // Predicated region
        $region89: #{tpu_custom_call.1} parent=55 // pred_check
          %p820 = pneg %p378
        $region90: #{tpu_custom_call.1} parent=55 // pred_check_branch
          %822 = sbr.rel (%p820) target = $region92
        $region91: #{tpu_custom_call.1} parent=55 // pred_region
          %824 = vsyncadd %s784, 0
          %s825 = sadd.s32 %s43, %s44
          %s826 = sadd.s32 %s825, %s42
          %s827 = smul.addr %s826, 4
          %s828 = scalar_lea.hbm %s11, %s827
          %s830 = sshll.u32 %s787, 4
          %s831 = int_to_ptr.vmem [resolvable:$true] %s830
          %s832 = sshll.u32 %s828, 4
          %s833 = int_to_ptr.hbm [resolvable:$true] %s832
          %835 = dma.vmem_to_hbm [thread:$0]  %s831, 64, %s833, %s784
        $region92: #{tpu_custom_call.1} parent=55 // pred_fallthru
          _
      $region56: #{tpu_custom_call.1} parent=5 // pred_fallthru
        _
      %p836 = scmp.le.s32.totalorder 2, %s32
      // Predicated region
      $region93: #{tpu_custom_call.1} parent=5 // pred_check
        %p837 = pneg %p836
      $region94: #{tpu_custom_call.1} parent=5 // pred_check_branch
        %839 = sbr.rel (%p837) target = $region96
      $region95: #{tpu_custom_call.1} parent=5 // pred_region
        %s840 = ssub.s32 %s32, 2
        // Predicated region
        $region97: #{tpu_custom_call.1} parent=95 // pred_check
          %p841 = pneg %p324
        $region98: #{tpu_custom_call.1} parent=95 // pred_check_branch
          %843 = sbr.rel (%p841) target = $region100
        $region99: #{tpu_custom_call.1} parent=95 // pred_region
          %s844 = sand.u32 %s309, 1
          %s845 = scalar_lea.sflag [#allocation4], %s844
          %s846 = sand.u32 %s309, 1
          %s847 = smul.addr %s846, 4
          %s848 = scalar_lea.vmem [#allocation13], %s847
          %850 = dma.done %s845, 64
        $region100: #{tpu_custom_call.1} parent=95 // pred_fallthru
          _
        // Predicated region
        $region101: #{tpu_custom_call.1} parent=95 // pred_check
          %p851 = pneg %p354
        $region102: #{tpu_custom_call.1} parent=95 // pred_check_branch
          %853 = sbr.rel (%p851) target = $region104
        $region103: #{tpu_custom_call.1} parent=95 // pred_region
          %s854 = sand.u32 %s38, 1
          %s855 = scalar_lea.sflag [#allocation15], %s854
          %s856 = sand.u32 %s339, 1
          %s857 = smul.addr %s856, 4
          %s858 = scalar_lea.vmem [#allocation14], %s857
          %860 = dma.done %s855, 64
        $region104: #{tpu_custom_call.1} parent=95 // pred_fallthru
          _
        // Predicated region
        $region105: #{tpu_custom_call.1} parent=95 // pred_check
          %p861 = pneg %p384
        $region106: #{tpu_custom_call.1} parent=95 // pred_check_branch
          %863 = sbr.rel (%p861) target = $region108
        $region107: #{tpu_custom_call.1} parent=95 // pred_region
          %s864 = sand.u32 %s38, 1
          %s865 = scalar_lea.sflag [#allocation15], %s864
          %s866 = sand.u32 %s369, 1
          %s867 = smul.addr %s866, 4
          %s868 = scalar_lea.vmem [#allocation16], %s867
          %870 = dma.done %s865, 64
        $region108: #{tpu_custom_call.1} parent=95 // pred_fallthru
          _
      $region96: #{tpu_custom_call.1} parent=5 // pred_fallthru
        _
    $region6: #{tpu_custom_call.1} parent=1 // loop_footer
      %s36 = sadd.s32 1, %s32
    $region7: #{tpu_custom_call.1} parent=1 // loop_footer_branch
      %31 = sbr.rel target = $region3
    $region8: #{tpu_custom_call.1} parent=1 // loop_exit
      _
    %871 = vsyncpa [#allocation3], 1
    %s872 = scalar_lea.sflag [#allocation3], 1
    %873 = vsyncpa %s872, 1
    %874 = vsyncpa [#allocation6], 1
    %s875 = scalar_lea.sflag [#allocation6], 1
    %876 = vsyncpa %s875, 1
    %877 = vsyncpa [#allocation9], 1
    %878 = vsyncpa [#allocation12], 1
    %879 = vsyncpa [#allocation4], 1
    %s880 = scalar_lea.sflag [#allocation4], 1
    %881 = vsyncpa %s880, 1
    %882 = vsyncpa [#allocation15], 1
    %s883 = scalar_lea.sflag [#allocation15], 1
    %884 = vsyncpa %s883, 1

</llo_original>
